<compile_context>
chip_gen: v6e
topology: v6e:2x2x1
jax: 0.10.0
libtpu: 0.0.40
codegen_flags: <defaults>
</compile_context>

<pallas_src>
import functools

import jax
import jax.numpy as jnp
from jax.experimental import pallas as pl
from jax.experimental.pallas import tpu as pltpu


def _round_up(x, m):
    return ((x + m - 1) // m) * m


def _vmem_capacity_bytes():
    """Physical VMEM per core; conservative 64 MiB fallback (v7x per-TC)."""
    get_info = getattr(pltpu, "get_tpu_info", None)
    if get_info is None:
        return 64 << 20
    try:
        cap = getattr(get_info(), "vmem_capacity_bytes", None)
        return int(cap) if cap else (64 << 20)
    except Exception:
        return 64 << 20


def _ffn_kernel(x_ref, w1_ref, b1_ref, w2_ref, b2_ref, o_ref, acc_ref):
    # x_ref:  (tm, dm_pad)    row tile, already in compute dtype (resident over k)
    # w1_ref: (dm_pad, tdff)  W1^T slab for this dff block (contiguous in HBM)
    # b1_ref: (1, tdff)       f32
    # w2_ref: (tdff, dm_pad)  W2^T slab for this dff block (contiguous in HBM)
    # b2_ref: (1, dm_pad)     f32
    # o_ref:  (tm, dm_pad)
    # acc_ref:(tm, dm_pad)    f32 accumulator scratch
    k = pl.program_id(1)

    @pl.when(k == 0)
    def _():
        # Fuse b2 into the accumulator init (one broadcast per row tile).
        acc_ref[...] = jnp.broadcast_to(b2_ref[...], acc_ref.shape)

    # First matmul over this dff slab; f32 accumulation on the MXU.
    h = jnp.dot(x_ref[...], w1_ref[...], preferred_element_type=jnp.float32)
    h = jnp.maximum(h + b1_ref[...], 0.0)  # bias1 + ReLU (elementwise over dff)
    # Dropout: identity (inference mode).
    acc_ref[...] += jnp.dot(h.astype(w2_ref.dtype), w2_ref[...],
                            preferred_element_type=jnp.float32)

    @pl.when(k == pl.num_programs(1) - 1)
    def _():
        o_ref[...] = acc_ref[...].astype(o_ref.dtype)


def prepare_ffn_params(w1, b1, w2, b2, *, block_dff=512,
                       compute_dtype=jnp.bfloat16, lane_multiple=256):
    """One-time (load-time) conversion from PyTorch nn.Linear layout to kernel layout.

    Args:
      w1: (dff, dm)  nn.Linear(dm, dff).weight
      b1: (dff,)
      w2: (dm, dff)  nn.Linear(dff, dm).weight
      b2: (dm,)
      block_dff: dff tile size (baked into the blocked weight layout).
      compute_dtype: matmul dtype for weights/activations (bf16 by default;
        accumulation stays f32 inside the kernel). Pass jnp.float32 for exact
        f32 math.
      lane_multiple: padding multiple for dm/dff (256 = v6e/v7x MXU tile).
    Returns:
      (w1_blk, b1_p, w2_blk, b2_p):
        w1_blk: (n_k, dm_pad, tdff)  contiguous per-k slabs of W1^T
        b1_p:   (1, dff_pad)         f32
        w2_blk: (n_k, tdff, dm_pad)  contiguous per-k slabs of W2^T
        b2_p:   (1, dm_pad)          f32
    """
    w1 = jnp.asarray(w1)
    w2 = jnp.asarray(w2)
    dff, dm = w1.shape
    cdt = compute_dtype if compute_dtype is not None else w1.dtype

    dm_pad = _round_up(dm, lane_multiple)
    tdff = min(block_dff, _round_up(dff, lane_multiple))
    dff_pad = _round_up(dff, tdff)
    n_k = dff_pad // tdff

    w1_t = jnp.zeros((dm_pad, dff_pad), cdt).at[:dm, :dff].set(w1.T.astype(cdt))
    w2_t = jnp.zeros((dff_pad, dm_pad), cdt).at[:dff, :dm].set(w2.T.astype(cdt))
    # Pre-block so each k slab is a single contiguous HBM region.
    w1_blk = w1_t.reshape(dm_pad, n_k, tdff).transpose(1, 0, 2)  # (n_k, dm_pad, tdff)
    w2_blk = w2_t.reshape(n_k, tdff, dm_pad)                     # (n_k, tdff, dm_pad)

    b1_p = jnp.zeros((1, dff_pad), jnp.float32).at[0, :dff].set(
        jnp.asarray(b1).astype(jnp.float32))
    b2_p = jnp.zeros((1, dm_pad), jnp.float32).at[0, :dm].set(
        jnp.asarray(b2).astype(jnp.float32))
    return w1_blk, b1_p, w2_blk, b2_p


@functools.partial(jax.jit, static_argnames=("block_rows",))
def feed_forward_network(x, w1_blk, b1_p, w2_blk, b2_p, *, block_rows=None):
    """Pallas FFN forward.

    Args:
      x:      (batch, seq, dm)
      w1_blk: (n_k, dm_pad, tdff)  from prepare_ffn_params
      b1_p:   (1, dff_pad)
      w2_blk: (n_k, tdff, dm_pad)
      b2_p:   (1, dm_pad)
      block_rows: row-tile size; None = generation-aware default.
    Returns:
      (batch, seq, dm), dtype of x.
    """
    batch, seq, dm = x.shape
    n_k, dm_pad, tdff = w1_blk.shape
    dff_pad = n_k * tdff
    m = batch * seq

    out_dtype = x.dtype
    xb = jnp.dtype(w1_blk.dtype).itemsize      # x is cast to compute dtype below
    wb = jnp.dtype(w1_blk.dtype).itemsize
    ob = jnp.dtype(out_dtype).itemsize

    # --- Generation-aware VMEM budget and row tile --------------------------
    cap = _vmem_capacity_bytes()
    budget = int(cap * 0.85)                    # leave room for Mosaic scratch
    headroom = 8 << 20

    if block_rows is None:
        # Big row tile amortizes weight streaming (intensity ~ 2*tm/wb FLOP/byte).
        block_rows = 768 if cap >= (100 << 20) else 512

    def needed_bytes(tm_):
        return (2 * tm_ * dm_pad * xb           # x tile (double buffered)
                + 2 * dm_pad * tdff * wb        # W1^T slab (double buffered)
                + 2 * tdff * dm_pad * wb        # W2^T slab (double buffered)
                + tm_ * dm_pad * ob             # output tile (written once/row tile)
                + tm_ * dm_pad * 4              # f32 accumulator
                + 2 * (tdff + dm_pad) * 4)      # bias slabs

    tm = max(8, min(_round_up(block_rows, 8), _round_up(m, 8)))
    while tm > 8 and needed_bytes(tm) + headroom > budget:
        tm = max(8, _round_up(tm // 2, 8))
    needed = needed_bytes(tm)
    vmem_limit = max(min(needed + headroom, budget), min(32 << 20, budget))

    m_pad = _round_up(m, tm)
    grid = (m_pad // tm, n_k)

    # --- Activations: cast once (wrapper), pad only if needed ---------------
    x2d = x.reshape(m, dm)
    if x2d.dtype != w1_blk.dtype:
        x2d = x2d.astype(w1_blk.dtype)
    if (m_pad, dm_pad) != (m, dm):
        x2d = jnp.pad(x2d, ((0, m_pad - m), (0, dm_pad - dm)))

    cost = pl.CostEstimate(
        flops=4 * m_pad * dm_pad * dff_pad,
        transcendentals=0,
        bytes_accessed=int(m_pad * dm_pad * (xb + ob)
                           + (m_pad // tm) * 2 * dm_pad * dff_pad * wb
                           + 4 * (dff_pad + dm_pad)),
    )

    out2d = pl.pallas_call(
        _ffn_kernel,
        out_shape=jax.ShapeDtypeStruct((m_pad, dm_pad), out_dtype),
        grid_spec=pltpu.PrefetchScalarGridSpec(
            num_scalar_prefetch=0,
            grid=grid,
            in_specs=[
                pl.BlockSpec((tm, dm_pad), lambda i, k: (i, 0)),          # x rows
                pl.BlockSpec((None, dm_pad, tdff), lambda i, k: (k, 0, 0)),  # W1^T slab
                pl.BlockSpec((1, tdff), lambda i, k: (0, k)),             # b1 slab
                pl.BlockSpec((None, tdff, dm_pad), lambda i, k: (k, 0, 0)),  # W2^T slab
                pl.BlockSpec((1, dm_pad), lambda i, k: (0, 0)),           # b2
            ],
            out_specs=pl.BlockSpec((tm, dm_pad), lambda i, k: (i, 0)),
            scratch_shapes=[pltpu.VMEM((tm, dm_pad), jnp.float32)],
        ),
        compiler_params=pltpu.CompilerParams(
            dimension_semantics=("parallel", "arbitrary"),
            vmem_limit_bytes=int(vmem_limit)),
        cost_estimate=cost,
    )(x2d, w1_blk, b1_p, w2_blk, b2_p)

    return out2d[:m, :dm].reshape(batch, seq, dm)


def _reference(x, w1, b1, w2, b2):
    h = jnp.maximum(jnp.einsum("bsd,fd->bsf", x, w1) + b1, 0.0)
    return jnp.einsum("bsf,df->bsd", h, w2) + b2


if __name__ == "__main__":
    # Small, deterministic shapes consistent with the module.
    batch, seq, dm, dff = 2, 8, 32, 64

    key = jax.random.PRNGKey(0)
    k_x, k_w1, k_b1, k_w2, k_b2, k_x2 = jax.random.split(key, 6)

    x = jax.random.normal(k_x, (batch, seq, dm), dtype=jnp.float32)
    # Deterministic "nn.Linear"-style params (PyTorch layout, synthetic init).
    w1 = jax.random.uniform(k_w1, (dff, dm), minval=-0.1, maxval=0.1, dtype=jnp.float32)
    b1 = jax.random.uniform(k_b1, (dff,), minval=-0.1, maxval=0.1, dtype=jnp.float32)
    w2 = jax.random.uniform(k_w2, (dm, dff), minval=-0.1, maxval=0.1, dtype=jnp.float32)
    b2 = jax.random.uniform(k_b2, (dm,), minval=-0.1, maxval=0.1, dtype=jnp.float32)

    ref = _reference(x, w1, b1, w2, b2)

    # 1) Default (bf16 compute, f32 accumulation) — looser tolerance for bf16.
    params_bf16 = prepare_ffn_params(w1, b1, w2, b2)  # compute_dtype=bf16 default
    out = jax.block_until_ready(feed_forward_network(x, *params_bf16))
    assert out.shape == (batch, seq, dm)
    assert jnp.allclose(out, ref, atol=3e-2, rtol=3e-2), "mismatch vs reference (bf16)"

    # 2) Exact f32 path — tight tolerance.
    params_f32 = prepare_ffn_params(w1, b1, w2, b2, compute_dtype=jnp.float32)
    out_f32 = jax.block_until_ready(feed_forward_network(x, *params_f32))
    assert jnp.allclose(out_f32, ref, atol=1e-4, rtol=1e-4), "mismatch vs reference (f32)"

    # 3) Row count not divisible by 8 (exercises the row-padding path).
    x_odd = jax.random.normal(k_x2, (batch, 5, dm), dtype=jnp.float32)
    out_odd = jax.block_until_ready(feed_forward_network(x_odd, *params_f32))
    ref_odd = _reference(x_odd, w1, b1, w2, b2)
    assert out_odd.shape == (batch, 5, dm)
    assert jnp.allclose(out_odd, ref_odd, atol=1e-4, rtol=1e-4), "mismatch (padded path)"

    print("KERNEL_OK")
</pallas_src>

<mosaic_0001>
module attributes {stable_mosaic.version = 11 : i64} {
  func.func @_ffn_kernel(%arg0: i32, %arg1: i32, %arg2: memref<16x256xbf16, #tpu.memory_space<vmem>>, %arg3: memref<1x256x256xbf16, #tpu.memory_space<vmem>>, %arg4: memref<1x256xf32, #tpu.memory_space<vmem>>, %arg5: memref<1x256x256xbf16, #tpu.memory_space<vmem>>, %arg6: memref<1x256xf32, #tpu.memory_space<vmem>>, %arg7: memref<16x256xf32, #tpu.memory_space<vmem>>, %arg8: memref<16x256xf32, #tpu.memory_space<vmem>>) attributes {dimension_semantics = [#tpu.dimension_semantics<parallel>, #tpu.dimension_semantics<arbitrary>], iteration_bounds = array<i64: 1, 1>, scalar_prefetch = 0 : i64, scratch_operands = 1 : i64, tpu.core_type = #tpu.core_type<tc>, window_params = [{transform_indices = @transform_0, window_bounds = array<i64: 16, 256>}, {transform_indices = @transform_1, window_bounds = array<i64: 1, 256, 256>}, {transform_indices = @transform_2, window_bounds = array<i64: 1, 256>}, {transform_indices = @transform_3, window_bounds = array<i64: 1, 256, 256>}, {pipeline_mode = #tpu.pipeline_mode<synchronous>, transform_indices = @transform_4, window_bounds = array<i64: 1, 256>}, {transform_indices = @transform_5, window_bounds = array<i64: 16, 256>}]} {
    %c0_i32 = arith.constant 0 : i32
    %0 = arith.cmpi eq, %arg1, %c0_i32 : i32
    %1 = arith.extui %0 : i1 to i32
    %c0_i32_0 = arith.constant 0 : i32
    %2 = arith.cmpi ne, %1, %c0_i32_0 : i32
    scf.if %2 {
      %c0_18 = arith.constant 0 : index
      %c0_19 = arith.constant 0 : index
      %22 = vector.load %arg6[%c0_18, %c0_19] : memref<1x256xf32, #tpu.memory_space<vmem>>, vector<1x256xf32>
      %23 = vector.shape_cast %22 : vector<1x256xf32> to vector<1x256xf32>
      %24 = vector.broadcast %23 : vector<1x256xf32> to vector<16x256xf32>
      %c0_20 = arith.constant 0 : index
      %c0_21 = arith.constant 0 : index
      %25 = vector.load %arg8[%c0_20, %c0_21] : memref<16x256xf32, #tpu.memory_space<vmem>>, vector<16x256xf32>
      tpu.vector_store %arg8[%c0_20, %c0_21], %24 {strides = array<i32>} : memref<16x256xf32, #tpu.memory_space<vmem>>, vector<16x256xf32>,
    } else {
    }
    %c0 = arith.constant 0 : index
    %c0_1 = arith.constant 0 : index
    %3 = vector.load %arg2[%c0, %c0_1] : memref<16x256xbf16, #tpu.memory_space<vmem>>, vector<16x256xbf16>
    %c0_2 = arith.constant 0 : index
    %c0_3 = arith.constant 0 : index
    %c0_4 = arith.constant 0 : index
    %4 = vector.load %arg3[%c0_2, %c0_3, %c0_4] : memref<1x256x256xbf16, #tpu.memory_space<vmem>>, vector<1x256x256xbf16>
    %5 = vector.shape_cast %4 : vector<1x256x256xbf16> to vector<256x256xbf16>
    %cst = arith.constant dense<0.000000e+00> : vector<16x256xf32>
    %6 = tpu.matmul %3, %5, %cst {dimension_numbers = #tpu.dot_dimension_numbers<[1], [0], [0], [1], [0, 0, 1, 1], [], []>} : vector<16x256xbf16>, vector<256x256xbf16>, vector<16x256xf32> -> vector<16x256xf32>
    %c0_5 = arith.constant 0 : index
    %c0_6 = arith.constant 0 : index
    %7 = vector.load %arg4[%c0_5, %c0_6] : memref<1x256xf32, #tpu.memory_space<vmem>>, vector<1x256xf32>
    %8 = vector.broadcast %7 : vector<1x256xf32> to vector<16x256xf32>
    %9 = arith.addf %6, %8 : vector<16x256xf32>
    %cst_7 = arith.constant 0.000000e+00 : f32
    %10 = vector.broadcast %cst_7 : f32 to vector<16x256xf32>
    %11 = arith.maximumf %9, %10 : vector<16x256xf32>
    %c0_8 = arith.constant 0 : index
    %c0_9 = arith.constant 0 : index
    %12 = vector.load %arg8[%c0_8, %c0_9] : memref<16x256xf32, #tpu.memory_space<vmem>>, vector<16x256xf32>
    %13 = arith.truncf %11 : vector<16x256xf32> to vector<16x256xbf16>
    %c0_10 = arith.constant 0 : index
    %c0_11 = arith.constant 0 : index
    %c0_12 = arith.constant 0 : index
    %14 = vector.load %arg5[%c0_10, %c0_11, %c0_12] : memref<1x256x256xbf16, #tpu.memory_space<vmem>>, vector<1x256x256xbf16>
    %15 = vector.shape_cast %14 : vector<1x256x256xbf16> to vector<256x256xbf16>
    %cst_13 = arith.constant dense<0.000000e+00> : vector<16x256xf32>
    %16 = tpu.matmul %13, %15, %cst_13 {dimension_numbers = #tpu.dot_dimension_numbers<[1], [0], [0], [1], [0, 0, 1, 1], [], []>} : vector<16x256xbf16>, vector<256x256xbf16>, vector<16x256xf32> -> vector<16x256xf32>
    %17 = arith.addf %12, %16 : vector<16x256xf32>
    %c0_14 = arith.constant 0 : index
    %c0_15 = arith.constant 0 : index
    %18 = vector.load %arg8[%c0_14, %c0_15] : memref<16x256xf32, #tpu.memory_space<vmem>>, vector<16x256xf32>
    tpu.vector_store %arg8[%c0_14, %c0_15], %17 {strides = array<i32>} : memref<16x256xf32, #tpu.memory_space<vmem>>, vector<16x256xf32>,
    %c0_i32_16 = arith.constant 0 : i32
    %19 = arith.cmpi eq, %arg1, %c0_i32_16 : i32
    %20 = arith.extui %19 : i1 to i32
    %c0_i32_17 = arith.constant 0 : i32
    %21 = arith.cmpi ne, %20, %c0_i32_17 : i32
    scf.if %21 {
      %c0_18 = arith.constant 0 : index
      %c0_19 = arith.constant 0 : index
      %22 = vector.load %arg8[%c0_18, %c0_19] : memref<16x256xf32, #tpu.memory_space<vmem>>, vector<16x256xf32>
      %c0_20 = arith.constant 0 : index
      %c0_21 = arith.constant 0 : index
      %23 = vector.load %arg7[%c0_20, %c0_21] : memref<16x256xf32, #tpu.memory_space<vmem>>, vector<16x256xf32>
      tpu.vector_store %arg7[%c0_20, %c0_21], %22 {strides = array<i32>} : memref<16x256xf32, #tpu.memory_space<vmem>>, vector<16x256xf32>,
    } else {
    }
    return
  }
  func.func @transform_0(%arg0: i32, %arg1: i32) -> (i32, i32) {
    %c0_i32 = arith.constant 0 : i32
    %c0_i32_0 = arith.constant 0 : i32
    return %arg0, %c0_i32 : i32, i32
  }
  func.func @transform_1(%arg0: i32, %arg1: i32) -> (i32, i32, i32) {
    %c0_i32 = arith.constant 0 : i32
    %c0_i32_0 = arith.constant 0 : i32
    %c0_i32_1 = arith.constant 0 : i32
    return %arg1, %c0_i32, %c0_i32_0 : i32, i32, i32
  }
  func.func @transform_2(%arg0: i32, %arg1: i32) -> (i32, i32) {
    %c0_i32 = arith.constant 0 : i32
    %c0_i32_0 = arith.constant 0 : i32
    return %c0_i32, %arg1 : i32, i32
  }
  func.func @transform_3(%arg0: i32, %arg1: i32) -> (i32, i32, i32) {
    %c0_i32 = arith.constant 0 : i32
    %c0_i32_0 = arith.constant 0 : i32
    %c0_i32_1 = arith.constant 0 : i32
    return %arg1, %c0_i32, %c0_i32_0 : i32, i32, i32
  }
  func.func @transform_4(%arg0: i32, %arg1: i32) -> (i32, i32) {
    %c0_i32 = arith.constant 0 : i32
    %c0_i32_0 = arith.constant 0 : i32
    %c0_i32_1 = arith.constant 0 : i32
    return %c0_i32, %c0_i32_0 : i32, i32
  }
  func.func @transform_5(%arg0: i32, %arg1: i32) -> (i32, i32) {
    %c0_i32 = arith.constant 0 : i32
    %c0_i32_0 = arith.constant 0 : i32
    return %arg0, %c0_i32 : i32, i32
  }
}

</mosaic_0001>

<llo_original>
// kernel: feed_forward_network.1
$region0: #{feed_forward_network.1}
  #allocation0 [shape = 'u32[]', space=smem, size = 0x4, offset = 0x4, fixed_abs, tag = 'smem constant byte address 0x4 - core index']
  #allocation1 [shape = 'u32[144,128]{1,0:T(1,128)}', space=vmem, size = 0x12000, scoped, tag = 'internal scratch']
  #allocation2 [shape = 'f32[16,256]{1,0:T(8,128)}', space=vmem, size = 0x4000, scoped, tag = 'scratch operand']
  %s0 = inlined_call_operand.vmem [shape: bf16[16,256], index: 0, kind: input, shape index: {}]
  %s1 = inlined_call_operand.hbm [shape: bf16[1,256,256], index: 1, kind: input, shape index: {}]
  %s2 = inlined_call_operand.vmem [shape: f32[1,256], index: 2, kind: input, shape index: {}]
  %s3 = inlined_call_operand.hbm [shape: bf16[1,256,256], index: 3, kind: input, shape index: {}]
  %s4 = inlined_call_operand.vmem [shape: f32[1,256], index: 4, kind: input, shape index: {}]
  %s5 = inlined_call_operand.vmem [shape: f32[16,256], index: 5, kind: output, shape index: {}]
  %s6 = sld [smem:[#allocation0]]
  $region46: #{feed_forward_network.1} parent=0
    _
  %s8 = ssub.s32 1, %s6
  %s9 = scalar_select 0, %s8, %s6
  $region1: #{feed_forward_network.1} parent=0
    #allocation3 [shape = 'u8[131072]{0}', space=vmem, size = 0x20000, scoped, tag = 'input window, operand 1, single buffered']
    #allocation4 [shape = 's32[1]{0}', space=sflag, size = 0x4, scoped, tag = 'scoped memory for feed_forward_network.1']
    #allocation5 [shape = 'u8[131072]{0}', space=vmem, size = 0x20000, scoped, tag = 'input window, operand 3, single buffered']
    #allocation6 [shape = 's32[1]{0}', space=sflag, size = 0x4, scoped, tag = 'scoped memory for feed_forward_network.1']
    %10 = vsyncpa [#allocation4], 0
    %11 = vsyncpa [#allocation6], 0
    // Predicated region
    $region2: #{feed_forward_network.1} parent=1 // pred_check
      _
    $region3: #{feed_forward_network.1} parent=1 // pred_check_branch
      %13 = sbr.rel (0) target = $region5
    $region4: #{feed_forward_network.1} parent=1 // pred_region
      _
    $region5: #{feed_forward_network.1} parent=1 // pred_fallthru
      _
    // Predicated region
    $region6: #{feed_forward_network.1} parent=1 // pred_check
      _
    $region7: #{feed_forward_network.1} parent=1 // pred_check_branch
      %15 = sbr.rel (0) target = $region9
    $region8: #{feed_forward_network.1} parent=1 // pred_region
      %s17 = ssub.s32 4096, 4096
      %18 = vsyncadd [#allocation4], %s17
      %s19 = sshll.u32 [#allocation3], 4
      %s20 = int_to_ptr.vmem [resolvable:$true] %s19
      %25 = dma.hbm_to_vmem [thread:$0]  %s1, 4096, %s20, [#allocation4], 128, 128, 8
    $region9: #{feed_forward_network.1} parent=1 // pred_fallthru
      _
    // Predicated region
    $region10: #{feed_forward_network.1} parent=1 // pred_check
      _
    $region11: #{feed_forward_network.1} parent=1 // pred_check_branch
      %27 = sbr.rel (0) target = $region13
    $region12: #{feed_forward_network.1} parent=1 // pred_region
      _
    $region13: #{feed_forward_network.1} parent=1 // pred_fallthru
      _
    // Predicated region
    $region14: #{feed_forward_network.1} parent=1 // pred_check
      _
    $region15: #{feed_forward_network.1} parent=1 // pred_check_branch
      %29 = sbr.rel (0) target = $region17
    $region16: #{feed_forward_network.1} parent=1 // pred_region
      %s31 = ssub.s32 4096, 4096
      %32 = vsyncadd [#allocation6], %s31
      %s33 = sshll.u32 [#allocation5], 4
      %s34 = int_to_ptr.vmem [resolvable:$true] %s33
      %39 = dma.hbm_to_vmem [thread:$0]  %s3, 4096, %s34, [#allocation6], 128, 128, 8
    $region17: #{feed_forward_network.1} parent=1 // pred_fallthru
      _
    // Predicated region
    $region18: #{feed_forward_network.1} parent=1 // pred_check
      _
    $region19: #{feed_forward_network.1} parent=1 // pred_check_branch
      %41 = sbr.rel (0) target = $region21
    $region20: #{feed_forward_network.1} parent=1 // pred_region
      _
    $region21: #{feed_forward_network.1} parent=1 // pred_fallthru
      _
    // Predicated region
    $region22: #{feed_forward_network.1} parent=1 // pred_check
      _
    $region23: #{feed_forward_network.1} parent=1 // pred_check_branch
      %43 = sbr.rel (0) target = $region25
    $region24: #{feed_forward_network.1} parent=1 // pred_region
      %44 = dma.done [#allocation4], 4096
    $region25: #{feed_forward_network.1} parent=1 // pred_fallthru
      _
    // Predicated region
    $region26: #{feed_forward_network.1} parent=1 // pred_check
      _
    $region27: #{feed_forward_network.1} parent=1 // pred_check_branch
      %46 = sbr.rel (0) target = $region29
    $region28: #{feed_forward_network.1} parent=1 // pred_region
      %47 = dma.done [#allocation6], 4096
    $region29: #{feed_forward_network.1} parent=1 // pred_fallthru
      _
    %p48 = scmp.eq.s32.totalorder 0, 0
    // Predicated region
    $region30: #{feed_forward_network.1} parent=1 // pred_check
      %p49 = pneg %p48
    $region31: #{feed_forward_network.1} parent=1 // pred_check_branch
      %51 = sbr.rel (%p49) target = $region33
    $region32: #{feed_forward_network.1} parent=1 // pred_region
      %v52 = vld [vmem:[%s4] sm:$0x3]
      %v54 = vlaneseq
      %v55 = vshrl.u32 %v54, 7
      %v56 = vsub.s32 0, %v55
      %v57 = vrot.slane %v52, %v56
      %v58 = vlaneseq
      %v59 = vshrl.u32 %v58, 7
      %v60 = vsub.s32 1, %v59
      %v61 = vrot.slane %v52, %v60
      %64 = vst [vmem:[#allocation2] sm:$0xff] %v57
      %65 = vst [vmem:[#allocation2 + $0x8] sm:$0xff] %v61
      %66 = vst [vmem:[#allocation2 + $0x10] sm:$0xff] %v57
      %67 = vst [vmem:[#allocation2 + $0x18] sm:$0xff] %v61
    $region33: #{feed_forward_network.1} parent=1 // pred_fallthru
      _
    %v68 = vld [vmem:[%s0] sm:$0xff]
    %v69 = vld [vmem:[%s0 + $0x8] sm:$0xff]
    %v70 = vld [vmem:[#allocation3] sm:$0xff]
    %v71 = vld [vmem:[#allocation3 + $0x8] sm:$0xff]
    %v72 = vld [vmem:[#allocation3 + $0x10] sm:$0xff]
    %v73 = vld [vmem:[#allocation3 + $0x18] sm:$0xff]
    %v74 = vld [vmem:[#allocation3 + $0x20] sm:$0xff]
    %v75 = vld [vmem:[#allocation3 + $0x28] sm:$0xff]
    %v76 = vld [vmem:[#allocation3 + $0x30] sm:$0xff]
    %v77 = vld [vmem:[#allocation3 + $0x38] sm:$0xff]
    %v78 = vld [vmem:[#allocation3 + $0x40] sm:$0xff]
    %v79 = vld [vmem:[#allocation3 + $0x48] sm:$0xff]
    %v80 = vld [vmem:[#allocation3 + $0x50] sm:$0xff]
    %v81 = vld [vmem:[#allocation3 + $0x58] sm:$0xff]
    %v82 = vld [vmem:[#allocation3 + $0x60] sm:$0xff]
    %v83 = vld [vmem:[#allocation3 + $0x68] sm:$0xff]
    %v84 = vld [vmem:[#allocation3 + $0x70] sm:$0xff]
    %v85 = vld [vmem:[#allocation3 + $0x78] sm:$0xff]
    %v86 = vld [vmem:[#allocation3 + $0x80] sm:$0xff]
    %v87 = vld [vmem:[#allocation3 + $0x88] sm:$0xff]
    %v88 = vld [vmem:[#allocation3 + $0x90] sm:$0xff]
    %v89 = vld [vmem:[#allocation3 + $0x98] sm:$0xff]
    %v90 = vld [vmem:[#allocation3 + $0xa0] sm:$0xff]
    %v91 = vld [vmem:[#allocation3 + $0xa8] sm:$0xff]
    %v92 = vld [vmem:[#allocation3 + $0xb0] sm:$0xff]
    %v93 = vld [vmem:[#allocation3 + $0xb8] sm:$0xff]
    %v94 = vld [vmem:[#allocation3 + $0xc0] sm:$0xff]
    %v95 = vld [vmem:[#allocation3 + $0xc8] sm:$0xff]
    %v96 = vld [vmem:[#allocation3 + $0xd0] sm:$0xff]
    %v97 = vld [vmem:[#allocation3 + $0xd8] sm:$0xff]
    %v98 = vld [vmem:[#allocation3 + $0xe0] sm:$0xff]
    %v99 = vld [vmem:[#allocation3 + $0xe8] sm:$0xff]
    %v100 = vld [vmem:[#allocation3 + $0xf0] sm:$0xff]
    %v101 = vld [vmem:[#allocation3 + $0xf8] sm:$0xff]
    %v102 = vld [vmem:[%s2] sm:$0x3]
    %v104 = vlaneseq
    %v105 = vshrl.u32 %v104, 7
    %v106 = vsub.s32 0, %v105
    %v107 = vrot.slane %v102, %v106
    %v108 = vlaneseq
    %v109 = vshrl.u32 %v108, 7
    %v110 = vsub.s32 1, %v109
    %v111 = vrot.slane %v102, %v110
    %v116 = vunpack.c.l.b16 %v68
    %v117 = vunpack.c.h.b16 %v68
    %v118 = vunpack.c.l.b16 %v69
    %v119 = vunpack.c.h.b16 %v69
    %v120 = vpack.c.b16 %v118, %v116
    %v121 = vpack.c.b16 %v119, %v117
    %v156 = vunpack.c.l.b16 %v70
    %v157 = vunpack.c.h.b16 %v70
    %v158 = vunpack.c.l.b16 %v71
    %v159 = vunpack.c.h.b16 %v71
    %v160 = vunpack.c.l.b16 %v72
    %v161 = vunpack.c.h.b16 %v72
    %v162 = vunpack.c.l.b16 %v73
    %v163 = vunpack.c.h.b16 %v73
    %v164 = vunpack.c.l.b16 %v74
    %v165 = vunpack.c.h.b16 %v74
    %v166 = vunpack.c.l.b16 %v75
    %v167 = vunpack.c.h.b16 %v75
    %v168 = vunpack.c.l.b16 %v76
    %v169 = vunpack.c.h.b16 %v76
    %v170 = vunpack.c.l.b16 %v77
    %v171 = vunpack.c.h.b16 %v77
    %v172 = vunpack.c.l.b16 %v78
    %v173 = vunpack.c.h.b16 %v78
    %v174 = vunpack.c.l.b16 %v79
    %v175 = vunpack.c.h.b16 %v79
    %v176 = vunpack.c.l.b16 %v80
    %v177 = vunpack.c.h.b16 %v80
    %v178 = vunpack.c.l.b16 %v81
    %v179 = vunpack.c.h.b16 %v81
    %v180 = vunpack.c.l.b16 %v82
    %v181 = vunpack.c.h.b16 %v82
    %v182 = vunpack.c.l.b16 %v83
    %v183 = vunpack.c.h.b16 %v83
    %v184 = vunpack.c.l.b16 %v84
    %v185 = vunpack.c.h.b16 %v84
    %v186 = vunpack.c.l.b16 %v85
    %v187 = vunpack.c.h.b16 %v85
    %v188 = vunpack.c.l.b16 %v86
    %v189 = vunpack.c.h.b16 %v86
    %v190 = vunpack.c.l.b16 %v87
    %v191 = vunpack.c.h.b16 %v87
    %v192 = vunpack.c.l.b16 %v88
    %v193 = vunpack.c.h.b16 %v88
    %v194 = vunpack.c.l.b16 %v89
    %v195 = vunpack.c.h.b16 %v89
    %v196 = vunpack.c.l.b16 %v90
    %v197 = vunpack.c.h.b16 %v90
    %v198 = vunpack.c.l.b16 %v91
    %v199 = vunpack.c.h.b16 %v91
    %v200 = vunpack.c.l.b16 %v92
    %v201 = vunpack.c.h.b16 %v92
    %v202 = vunpack.c.l.b16 %v93
    %v203 = vunpack.c.h.b16 %v93
    %v204 = vunpack.c.l.b16 %v94
    %v205 = vunpack.c.h.b16 %v94
    %v206 = vunpack.c.l.b16 %v95
    %v207 = vunpack.c.h.b16 %v95
    %v208 = vunpack.c.l.b16 %v96
    %v209 = vunpack.c.h.b16 %v96
    %v210 = vunpack.c.l.b16 %v97
    %v211 = vunpack.c.h.b16 %v97
    %v212 = vunpack.c.l.b16 %v98
    %v213 = vunpack.c.h.b16 %v98
    %v214 = vunpack.c.l.b16 %v99
    %v215 = vunpack.c.h.b16 %v99
    %v216 = vunpack.c.l.b16 %v100
    %v217 = vunpack.c.h.b16 %v100
    %v218 = vunpack.c.l.b16 %v101
    %v219 = vunpack.c.h.b16 %v101
    %v220 = vpack.c.b16 %v158, %v156
    %v221 = vpack.c.b16 %v159, %v157
    %v222 = vpack.c.b16 %v162, %v160
    %v223 = vpack.c.b16 %v163, %v161
    %v224 = vpack.c.b16 %v166, %v164
    %v225 = vpack.c.b16 %v167, %v165
    %v226 = vpack.c.b16 %v170, %v168
    %v227 = vpack.c.b16 %v171, %v169
    %v228 = vpack.c.b16 %v174, %v172
    %v229 = vpack.c.b16 %v175, %v173
    %v230 = vpack.c.b16 %v178, %v176
    %v231 = vpack.c.b16 %v179, %v177
    %v232 = vpack.c.b16 %v182, %v180
    %v233 = vpack.c.b16 %v183, %v181
    %v234 = vpack.c.b16 %v186, %v184
    %v235 = vpack.c.b16 %v187, %v185
    %v236 = vpack.c.b16 %v190, %v188
    %v237 = vpack.c.b16 %v191, %v189
    %v238 = vpack.c.b16 %v194, %v192
    %v239 = vpack.c.b16 %v195, %v193
    %v240 = vpack.c.b16 %v198, %v196
    %v241 = vpack.c.b16 %v199, %v197
    %v242 = vpack.c.b16 %v202, %v200
    %v243 = vpack.c.b16 %v203, %v201
    %v244 = vpack.c.b16 %v206, %v204
    %v245 = vpack.c.b16 %v207, %v205
    %v246 = vpack.c.b16 %v210, %v208
    %v247 = vpack.c.b16 %v211, %v209
    %v248 = vpack.c.b16 %v214, %v212
    %v249 = vpack.c.b16 %v215, %v213
    %v250 = vpack.c.b16 %v218, %v216
    %v251 = vpack.c.b16 %v219, %v217
    %284 = vmatprep.subr.bf16.mxu0 %v235
    %285 = vmatpush1.bf16.msra.mxu0 %v234
    %286 = vmatprep.subr.bf16.mxu0 %v233
    %287 = vmatpush1.bf16.msra.mxu0 %v232
    %288 = vmatprep.subr.bf16.mxu0 %v231
    %289 = vmatpush1.bf16.msra.mxu0 %v230
    %290 = vmatprep.subr.bf16.mxu0 %v229
    %291 = vmatpush1.bf16.msra.mxu0 %v228
    %292 = vmatprep.subr.bf16.mxu0 %v227
    %293 = vmatpush1.bf16.msra.mxu0 %v226
    %294 = vmatprep.subr.bf16.mxu0 %v225
    %295 = vmatpush1.bf16.msra.mxu0 %v224
    %296 = vmatprep.subr.bf16.mxu0 %v223
    %297 = vmatpush1.bf16.msra.mxu0 %v222
    %298 = vmatprep.subr.bf16.mxu0 %v221
    %299 = vmatpush1.bf16.msra.mxu0 %v220
    %300 = vmatprep.subr.bf16.mxu0 %v251
    %301 = vmatpush2.bf16.msra.mxu0 %v250
    %302 = vmatprep.subr.bf16.mxu0 %v249
    %303 = vmatpush2.bf16.msra.mxu0 %v248
    %304 = vmatprep.subr.bf16.mxu0 %v247
    %305 = vmatpush2.bf16.msra.mxu0 %v246
    %306 = vmatprep.subr.bf16.mxu0 %v245
    %307 = vmatpush2.bf16.msra.mxu0 %v244
    %308 = vmatprep.subr.bf16.mxu0 %v243
    %309 = vmatpush2.bf16.msra.mxu0 %v242
    %310 = vmatprep.subr.bf16.mxu0 %v241
    %311 = vmatpush2.bf16.msra.mxu0 %v240
    %312 = vmatprep.subr.bf16.mxu0 %v239
    %313 = vmatpush2.bf16.msra.mxu0 %v238
    %314 = vmatprep.subr.bf16.mxu0 %v237
    %315 = vmatpush2.bf16.msra.mxu0 %v236
    %316 = vmatprep.mubr.bf16.mxu0 %v121
    %317 = vmatmul.mubr.bf16.gmra.mxu0 %v120
    %v318 = vpop.f32.mrf.mxu0
    %v319 = vadd.f32 %v107, %v318
    %v320 = vpop.f32.mrf.mxu0
    %v321 = vadd.f32 %v111, %v320
    %v322 = vpop.f32.mrf.mxu0
    %v323 = vadd.f32 %v107, %v322
    %v324 = vpop.f32.mrf.mxu0
    %v325 = vadd.f32 %v111, %v324
    %326 = vdwg.mxu0
    %v327 = vmax.f32 %v319, 0.0
    %v328 = vmax.f32 %v321, 0.0
    %v329 = vmax.f32 %v323, 0.0
    %v330 = vmax.f32 %v325, 0.0
    %v331 = vld [vmem:[#allocation2] sm:$0xff]
    %v332 = vld [vmem:[#allocation2 + $0x8] sm:$0xff]
    %v333 = vld [vmem:[#allocation2 + $0x10] sm:$0xff]
    %v334 = vld [vmem:[#allocation2 + $0x18] sm:$0xff]
    %v335 = vpack.c.bf16 %v329, %v327
    %v336 = vpack.c.bf16 %v330, %v328
    %v337 = vld [vmem:[#allocation5] sm:$0xff]
    %v338 = vld [vmem:[#allocation5 + $0x8] sm:$0xff]
    %v339 = vld [vmem:[#allocation5 + $0x10] sm:$0xff]
    %v340 = vld [vmem:[#allocation5 + $0x18] sm:$0xff]
    %v341 = vld [vmem:[#allocation5 + $0x20] sm:$0xff]
    %v342 = vld [vmem:[#allocation5 + $0x28] sm:$0xff]
    %v343 = vld [vmem:[#allocation5 + $0x30] sm:$0xff]
    %v344 = vld [vmem:[#allocation5 + $0x38] sm:$0xff]
    %v345 = vld [vmem:[#allocation5 + $0x40] sm:$0xff]
    %v346 = vld [vmem:[#allocation5 + $0x48] sm:$0xff]
    %v347 = vld [vmem:[#allocation5 + $0x50] sm:$0xff]
    %v348 = vld [vmem:[#allocation5 + $0x58] sm:$0xff]
    %v349 = vld [vmem:[#allocation5 + $0x60] sm:$0xff]
    %v350 = vld [vmem:[#allocation5 + $0x68] sm:$0xff]
    %v351 = vld [vmem:[#allocation5 + $0x70] sm:$0xff]
    %v352 = vld [vmem:[#allocation5 + $0x78] sm:$0xff]
    %v353 = vld [vmem:[#allocation5 + $0x80] sm:$0xff]
    %v354 = vld [vmem:[#allocation5 + $0x88] sm:$0xff]
    %v355 = vld [vmem:[#allocation5 + $0x90] sm:$0xff]
    %v356 = vld [vmem:[#allocation5 + $0x98] sm:$0xff]
    %v357 = vld [vmem:[#allocation5 + $0xa0] sm:$0xff]
    %v358 = vld [vmem:[#allocation5 + $0xa8] sm:$0xff]
    %v359 = vld [vmem:[#allocation5 + $0xb0] sm:$0xff]
    %v360 = vld [vmem:[#allocation5 + $0xb8] sm:$0xff]
    %v361 = vld [vmem:[#allocation5 + $0xc0] sm:$0xff]
    %v362 = vld [vmem:[#allocation5 + $0xc8] sm:$0xff]
    %v363 = vld [vmem:[#allocation5 + $0xd0] sm:$0xff]
    %v364 = vld [vmem:[#allocation5 + $0xd8] sm:$0xff]
    %v365 = vld [vmem:[#allocation5 + $0xe0] sm:$0xff]
    %v366 = vld [vmem:[#allocation5 + $0xe8] sm:$0xff]
    %v367 = vld [vmem:[#allocation5 + $0xf0] sm:$0xff]
    %v368 = vld [vmem:[#allocation5 + $0xf8] sm:$0xff]
    %v401 = vunpack.c.l.b16 %v337
    %v402 = vunpack.c.h.b16 %v337
    %v403 = vunpack.c.l.b16 %v338
    %v404 = vunpack.c.h.b16 %v338
    %v405 = vunpack.c.l.b16 %v339
    %v406 = vunpack.c.h.b16 %v339
    %v407 = vunpack.c.l.b16 %v340
    %v408 = vunpack.c.h.b16 %v340
    %v409 = vunpack.c.l.b16 %v341
    %v410 = vunpack.c.h.b16 %v341
    %v411 = vunpack.c.l.b16 %v342
    %v412 = vunpack.c.h.b16 %v342
    %v413 = vunpack.c.l.b16 %v343
    %v414 = vunpack.c.h.b16 %v343
    %v415 = vunpack.c.l.b16 %v344
    %v416 = vunpack.c.h.b16 %v344
    %v417 = vunpack.c.l.b16 %v345
    %v418 = vunpack.c.h.b16 %v345
    %v419 = vunpack.c.l.b16 %v346
    %v420 = vunpack.c.h.b16 %v346
    %v421 = vunpack.c.l.b16 %v347
    %v422 = vunpack.c.h.b16 %v347
    %v423 = vunpack.c.l.b16 %v348
    %v424 = vunpack.c.h.b16 %v348
    %v425 = vunpack.c.l.b16 %v349
    %v426 = vunpack.c.h.b16 %v349
    %v427 = vunpack.c.l.b16 %v350
    %v428 = vunpack.c.h.b16 %v350
    %v429 = vunpack.c.l.b16 %v351
    %v430 = vunpack.c.h.b16 %v351
    %v431 = vunpack.c.l.b16 %v352
    %v432 = vunpack.c.h.b16 %v352
    %v433 = vunpack.c.l.b16 %v353
    %v434 = vunpack.c.h.b16 %v353
    %v435 = vunpack.c.l.b16 %v354
    %v436 = vunpack.c.h.b16 %v354
    %v437 = vunpack.c.l.b16 %v355
    %v438 = vunpack.c.h.b16 %v355
    %v439 = vunpack.c.l.b16 %v356
    %v440 = vunpack.c.h.b16 %v356
    %v441 = vunpack.c.l.b16 %v357
    %v442 = vunpack.c.h.b16 %v357
    %v443 = vunpack.c.l.b16 %v358
    %v444 = vunpack.c.h.b16 %v358
    %v445 = vunpack.c.l.b16 %v359
    %v446 = vunpack.c.h.b16 %v359
    %v447 = vunpack.c.l.b16 %v360
    %v448 = vunpack.c.h.b16 %v360
    %v449 = vunpack.c.l.b16 %v361
    %v450 = vunpack.c.h.b16 %v361
    %v451 = vunpack.c.l.b16 %v362
    %v452 = vunpack.c.h.b16 %v362
    %v453 = vunpack.c.l.b16 %v363
    %v454 = vunpack.c.h.b16 %v363
    %v455 = vunpack.c.l.b16 %v364
    %v456 = vunpack.c.h.b16 %v364
    %v457 = vunpack.c.l.b16 %v365
    %v458 = vunpack.c.h.b16 %v365
    %v459 = vunpack.c.l.b16 %v366
    %v460 = vunpack.c.h.b16 %v366
    %v461 = vunpack.c.l.b16 %v367
    %v462 = vunpack.c.h.b16 %v367
    %v463 = vunpack.c.l.b16 %v368
    %v464 = vunpack.c.h.b16 %v368
    %v465 = vpack.c.b16 %v403, %v401
    %v466 = vpack.c.b16 %v404, %v402
    %v467 = vpack.c.b16 %v407, %v405
    %v468 = vpack.c.b16 %v408, %v406
    %v469 = vpack.c.b16 %v411, %v409
    %v470 = vpack.c.b16 %v412, %v410
    %v471 = vpack.c.b16 %v415, %v413
    %v472 = vpack.c.b16 %v416, %v414
    %v473 = vpack.c.b16 %v419, %v417
    %v474 = vpack.c.b16 %v420, %v418
    %v475 = vpack.c.b16 %v423, %v421
    %v476 = vpack.c.b16 %v424, %v422
    %v477 = vpack.c.b16 %v427, %v425
    %v478 = vpack.c.b16 %v428, %v426
    %v479 = vpack.c.b16 %v431, %v429
    %v480 = vpack.c.b16 %v432, %v430
    %v481 = vpack.c.b16 %v435, %v433
    %v482 = vpack.c.b16 %v436, %v434
    %v483 = vpack.c.b16 %v439, %v437
    %v484 = vpack.c.b16 %v440, %v438
    %v485 = vpack.c.b16 %v443, %v441
    %v486 = vpack.c.b16 %v444, %v442
    %v487 = vpack.c.b16 %v447, %v445
    %v488 = vpack.c.b16 %v448, %v446
    %v489 = vpack.c.b16 %v451, %v449
    %v490 = vpack.c.b16 %v452, %v450
    %v491 = vpack.c.b16 %v455, %v453
    %v492 = vpack.c.b16 %v456, %v454
    %v493 = vpack.c.b16 %v459, %v457
    %v494 = vpack.c.b16 %v460, %v458
    %v495 = vpack.c.b16 %v463, %v461
    %v496 = vpack.c.b16 %v464, %v462
    %529 = vmatprep.subr.bf16.mxu0 %v480
    %530 = vmatpush1.bf16.msra.mxu0 %v479
    %531 = vmatprep.subr.bf16.mxu0 %v478
    %532 = vmatpush1.bf16.msra.mxu0 %v477
    %533 = vmatprep.subr.bf16.mxu0 %v476
    %534 = vmatpush1.bf16.msra.mxu0 %v475
    %535 = vmatprep.subr.bf16.mxu0 %v474
    %536 = vmatpush1.bf16.msra.mxu0 %v473
    %537 = vmatprep.subr.bf16.mxu0 %v472
    %538 = vmatpush1.bf16.msra.mxu0 %v471
    %539 = vmatprep.subr.bf16.mxu0 %v470
    %540 = vmatpush1.bf16.msra.mxu0 %v469
    %541 = vmatprep.subr.bf16.mxu0 %v468
    %542 = vmatpush1.bf16.msra.mxu0 %v467
    %543 = vmatprep.subr.bf16.mxu0 %v466
    %544 = vmatpush1.bf16.msra.mxu0 %v465
    %545 = vmatprep.subr.bf16.mxu0 %v496
    %546 = vmatpush2.bf16.msra.mxu0 %v495
    %547 = vmatprep.subr.bf16.mxu0 %v494
    %548 = vmatpush2.bf16.msra.mxu0 %v493
    %549 = vmatprep.subr.bf16.mxu0 %v492
    %550 = vmatpush2.bf16.msra.mxu0 %v491
    %551 = vmatprep.subr.bf16.mxu0 %v490
    %552 = vmatpush2.bf16.msra.mxu0 %v489
    %553 = vmatprep.subr.bf16.mxu0 %v488
    %554 = vmatpush2.bf16.msra.mxu0 %v487
    %555 = vmatprep.subr.bf16.mxu0 %v486
    %556 = vmatpush2.bf16.msra.mxu0 %v485
    %557 = vmatprep.subr.bf16.mxu0 %v484
    %558 = vmatpush2.bf16.msra.mxu0 %v483
    %559 = vmatprep.subr.bf16.mxu0 %v482
    %560 = vmatpush2.bf16.msra.mxu0 %v481
    %561 = vmatprep.mubr.bf16.mxu0 %v336
    %562 = vmatmul.mubr.bf16.gmra.mxu0 %v335
    %v563 = vpop.f32.mrf.mxu0
    %v564 = vadd.f32 0.0, %v563
    %v565 = vpop.f32.mrf.mxu0
    %v566 = vadd.f32 0.0, %v565
    %v567 = vpop.f32.mrf.mxu0
    %v568 = vadd.f32 0.0, %v567
    %v569 = vpop.f32.mrf.mxu0
    %v570 = vadd.f32 0.0, %v569
    %571 = vdwg.mxu0
    %v572 = vadd.f32 %v331, %v564
    %v573 = vadd.f32 %v332, %v566
    %v574 = vadd.f32 %v333, %v568
    %v575 = vadd.f32 %v334, %v570
    %576 = vst [vmem:[#allocation2] sm:$0xff] %v572
    %577 = vst [vmem:[#allocation2 + $0x8] sm:$0xff] %v573
    %578 = vst [vmem:[#allocation2 + $0x10] sm:$0xff] %v574
    %579 = vst [vmem:[#allocation2 + $0x18] sm:$0xff] %v575
    // Predicated region
    $region34: #{feed_forward_network.1} parent=1 // pred_check
      %p580 = pneg %p48
    $region35: #{feed_forward_network.1} parent=1 // pred_check_branch
      %582 = sbr.rel (%p580) target = $region37
    $region36: #{feed_forward_network.1} parent=1 // pred_region
      %v583 = vld [vmem:[#allocation2] sm:$0xff]
      %v584 = vld [vmem:[#allocation2 + $0x8] sm:$0xff]
      %v585 = vld [vmem:[#allocation2 + $0x10] sm:$0xff]
      %v586 = vld [vmem:[#allocation2 + $0x18] sm:$0xff]
      %587 = vst [vmem:[%s5] sm:$0xff] %v583
      %588 = vst [vmem:[%s5 + $0x8] sm:$0xff] %v584
      %589 = vst [vmem:[%s5 + $0x10] sm:$0xff] %v585
      %590 = vst [vmem:[%s5 + $0x18] sm:$0xff] %v586
    $region37: #{feed_forward_network.1} parent=1 // pred_fallthru
      _
    // Predicated region
    $region38: #{feed_forward_network.1} parent=1 // pred_check
      _
    $region39: #{feed_forward_network.1} parent=1 // pred_check_branch
      %592 = sbr.rel (0) target = $region41
    $region40: #{feed_forward_network.1} parent=1 // pred_region
      _
    $region41: #{feed_forward_network.1} parent=1 // pred_fallthru
      _
    // Predicated region
    $region42: #{feed_forward_network.1} parent=1 // pred_check
      _
    $region43: #{feed_forward_network.1} parent=1 // pred_check_branch
      %594 = sbr.rel (0) target = $region45
    $region44: #{feed_forward_network.1} parent=1 // pred_region
      _
    $region45: #{feed_forward_network.1} parent=1 // pred_fallthru
      _
    %595 = vsyncpa [#allocation4], 1
    %596 = vsyncpa [#allocation6], 1

</llo_original>
